<compile_context>
chip_gen: v6e
topology: v6e:2x2x1
jax: 0.10.0
libtpu: 0.0.40
codegen_flags: <defaults>
</compile_context>

<pallas_src>
import functools

import jax
import jax.numpy as jnp
from jax.experimental import pallas as pl
from jax.experimental.pallas import tpu as pltpu


def _round_up(x: int, m: int) -> int:
    return ((x + m - 1) // m) * m


def _adapter_kernel(x_ref, wd_ref, bd_ref, wu_ref, bu_ref, o_ref):
    # x_ref:  (tm, Hp)   token tile, streamed dtype (bf16 -> MXU fast path)
    # wd_ref: (Hp, Rp)   down projection, resident
    # bd_ref: (1, Rp)    f32
    # wu_ref: (Rp, Hp)   up projection, resident
    # bu_ref: (1, Hp)    f32
    x = x_ref[...]
    h = jnp.dot(x, wd_ref[...], preferred_element_type=jnp.float32) + bd_ref[...]
    # TODO(synk): PyTorch nn.GELU defaults to exact erf; tanh approximation is
    # used here (EUP transcendental, matches the in-file reference, ~1e-3 delta).
    h = jax.nn.gelu(h, approximate=True)
    y = jnp.dot(h.astype(wu_ref.dtype), wu_ref[...],
                preferred_element_type=jnp.float32) + bu_ref[...]
    # residual connection of the bottleneck adapter (epilogue kept in f32)
    o_ref[...] = (y + x.astype(jnp.float32)).astype(o_ref.dtype)


@functools.lru_cache(maxsize=1)
def _single_buffer_supported() -> bool:
    """Probe once whether pipeline_mode=pl.Buffered(1) works for resident blocks."""
    def k(w_ref, o_ref):
        o_ref[...] = w_ref[...] * 2.0

    try:
        spec = pl.BlockSpec((8, 128), lambda i: (0, 0),
                            pipeline_mode=pl.Buffered(1))
        f = pl.pallas_call(
            k,
            out_shape=jax.ShapeDtypeStruct((8, 128), jnp.float32),
            grid=(2,),
            in_specs=[spec],
            out_specs=pl.BlockSpec((8, 128), lambda i: (0, 0)),
        )
        jax.block_until_ready(f(jnp.ones((8, 128), jnp.float32)))
        return True
    except Exception:
        return False


@functools.lru_cache(maxsize=1)
def _vmem_capacity_bytes() -> int:
    """Physical VMEM per TensorCore; conservative (v7x-class) fallback."""
    try:
        return int(pltpu.get_tpu_info().vmem_capacity_bytes)
    except Exception:
        return 64 << 20


def _resident_spec(shape, single_buffer: bool) -> pl.BlockSpec:
    idx = lambda i: tuple(0 for _ in shape)
    if single_buffer:
        return pl.BlockSpec(shape, idx, pipeline_mode=pl.Buffered(1))
    return pl.BlockSpec(shape, idx)


def _pad_params(w_down, b_down, w_up, b_up):
    """One-time lane-dense padding of adapter weights/biases."""
    H, R = w_down.shape
    Hp, Rp = _round_up(H, 128), _round_up(R, 128)
    wd = jnp.pad(w_down, ((0, Hp - H), (0, Rp - R)))
    wu = jnp.pad(w_up, ((0, Rp - R), (0, Hp - H)))
    bd = jnp.pad(b_down.astype(jnp.float32), (0, Rp - R)).reshape(1, Rp)
    bu = jnp.pad(b_up.astype(jnp.float32), (0, Hp - H)).reshape(1, Hp)
    return wd, bd, wu, bu


@functools.partial(jax.jit,
                   static_argnames=("tm", "single_buffer_weights", "stream_bf16"))
def _adapter_forward_jit(hidden_states, wd, bd, wu, bu, *, tm=512,
                         single_buffer_weights=False, stream_bf16=False):
    B, S, H = hidden_states.shape
    Hp, Rp = wd.shape
    out_dtype = hidden_states.dtype

    # Opt-in: stream activation tiles in bf16 (halves x read bytes; f32 output).
    x_dtype = jnp.bfloat16 if (stream_bf16 and out_dtype == jnp.float32) else out_dtype
    x_itemsize = jnp.dtype(x_dtype).itemsize

    if wd.dtype != x_dtype:
        wd = wd.astype(x_dtype)
        wu = wu.astype(x_dtype)
    w_itemsize = jnp.dtype(wd.dtype).itemsize

    M = B * S
    x2d = hidden_states.reshape(M, H)
    if x_dtype != out_dtype:
        x2d = x2d.astype(x_dtype)
    if Hp != H:
        # TODO(synk): non-128-aligned H pays one extra pad + slice HBM pass;
        # common transformer widths (256/768/1024/4096) take the aligned path.
        x2d = jnp.pad(x2d, ((0, 0), (0, Hp - H)))

    weight_bufs = 1 if single_buffer_weights else 2
    wmem = weight_bufs * (2 * Hp * Rp * w_itemsize + (Rp + Hp) * 4)

    def est(bm):
        io = 2 * 2 * bm * Hp * x_itemsize       # x + out tiles, double-buffered
        tmp = bm * (Rp + 2 * Hp) * 4            # in-kernel f32 h / y / x-upcast
        return io + tmp + wmem

    # Generation-aware VMEM budget (v7x: 64 MiB physical; v5e/v6e: 128 MiB).
    cap = _vmem_capacity_bytes()
    if cap <= (64 << 20):
        budget, limit_cap = 36 << 20, 44 << 20
    else:
        budget, limit_cap = 80 << 20, 100 << 20

    # Row tile: big by default, shrunk to fit VMEM and to keep >=4 grid steps
    # (2 TensorCores on v7x + pipeline overlap) when M allows.
    block_m = min(tm, _round_up(M, 8))
    while block_m > 128 and est(block_m) > budget:
        block_m //= 2
    while block_m > 128 and pl.cdiv(M, block_m) < 4:
        block_m //= 2
    block_m = max(8, _round_up(block_m, 8))
    grid_m = pl.cdiv(M, block_m)
    vmem_limit = int(min(max(est(block_m) + (8 << 20), 24 << 20), limit_cap))

    cost = pl.CostEstimate(
        flops=4 * M * Hp * Rp,
        transcendentals=M * Rp,
        bytes_accessed=(2 * M * Hp * x_itemsize
                        + 2 * Hp * Rp * w_itemsize + (Rp + Hp) * 4),
    )

    # TODO(synk): for very large adapters (2*H*R*itemsize approaching the VMEM
    # budget) a K/N grid axis over Hp would be needed; typical bottleneck
    # adapters (R <= 256) keep both weights comfortably resident.
    out2d = pl.pallas_call(
        _adapter_kernel,
        out_shape=jax.ShapeDtypeStruct((M, Hp), out_dtype),
        grid_spec=pltpu.PrefetchScalarGridSpec(
            num_scalar_prefetch=0,
            grid=(grid_m,),
            in_specs=[
                pl.BlockSpec((block_m, Hp), lambda i: (i, 0)),        # x tile
                _resident_spec((Hp, Rp), single_buffer_weights),      # W_down
                _resident_spec((1, Rp), single_buffer_weights),       # b_down
                _resident_spec((Rp, Hp), single_buffer_weights),      # W_up
                _resident_spec((1, Hp), single_buffer_weights),       # b_up
            ],
            out_specs=pl.BlockSpec((block_m, Hp), lambda i: (i, 0)),
        ),
        compiler_params=pltpu.CompilerParams(
            dimension_semantics=("parallel",),
            vmem_limit_bytes=vmem_limit),
        cost_estimate=cost,
    )(x2d, wd, bd, wu, bu)

    if Hp != H:
        out2d = out2d[:, :H]
    return out2d.reshape(B, S, H)


def adapter_forward(hidden_states, w_down, b_down, w_up, b_up, *, tm=512,
                    stream_bf16=False):
    """Apply one bottleneck adapter via a Pallas TPU kernel.

    hidden_states: (B, S, H)
    w_down: (H, R), b_down: (R,), w_up: (R, H), b_up: (H,)
    """
    wd, bd, wu, bu = _pad_params(w_down, b_down, w_up, b_up)
    return _adapter_forward_jit(
        hidden_states, wd, bd, wu, bu, tm=tm,
        single_buffer_weights=_single_buffer_supported(),
        stream_bf16=stream_bf16)


class CLAdapter:
    """JAX re-implementation of clacl CLAdapter's forward-path semantics.

    Holds a dict of per-task adapter parameter sets; forward() dispatches to
    the adapter of `current_task` (returns input unchanged if none).
    """
    # TODO(synk): set_grad / average_adapter / CLManager registry / save-load
    # are host-side training utilities and are not reproduced here.

    def __init__(self, hidden: int, bottleneck: int):
        self.hidden = hidden
        self.bottleneck = bottleneck
        self.adapters = {}           # task_name -> param dict
        self._current_task = None
        self._previous_task = None

    @property
    def current_task(self):
        return self._current_task

    @current_task.setter
    def current_task(self, val):
        self._previous_task = self._current_task
        self._current_task = val

    def add_adapter(self, task_name: str, key):
        """Deterministic synthetic factory for a bottleneck adapter.

        Weights are pre-padded to lane-dense (128-multiple) shapes here so the
        forward hot path never re-pads or re-casts them.
        """
        k1, k2 = jax.random.split(key)
        H, R = self.hidden, self.bottleneck
        w_down = jax.random.normal(k1, (H, R), jnp.float32) * 0.02
        w_up = jax.random.normal(k2, (R, H), jnp.float32) * 0.02
        b_down = jnp.zeros((R,), jnp.float32)
        b_up = jnp.zeros((H,), jnp.float32)
        wd_p, bd_p, wu_p, bu_p = _pad_params(w_down, b_down, w_up, b_up)
        self.adapters[task_name] = {
            "w_down": w_down, "b_down": b_down, "w_up": w_up, "b_up": b_up,
            "_wd_p": wd_p, "_bd_p": bd_p, "_wu_p": wu_p, "_bu_p": bu_p,
        }
        self.current_task = task_name

    def __call__(self, hidden_states, *, stream_bf16=False):
        if not self.current_task:
            # matches PyTorch: "do nothing to the input"
            return hidden_states
        p = self.adapters[self.current_task]
        return _adapter_forward_jit(
            hidden_states, p["_wd_p"], p["_bd_p"], p["_wu_p"], p["_bu_p"],
            tm=512, single_buffer_weights=_single_buffer_supported(),
            stream_bf16=stream_bf16)


def _reference(hidden_states, p):
    x = hidden_states.astype(jnp.float32)
    h = jax.nn.gelu(x @ p["w_down"] + p["b_down"], approximate=True)
    return (x + h @ p["w_up"] + p["b_up"]).astype(hidden_states.dtype)


if __name__ == "__main__":
    # --- small test matching the module's forward signature ---
    B, S, H, R = 2, 8, 32, 16
    key = jax.random.PRNGKey(0)
    k_x, k_t0, k_t1 = jax.random.split(key, 3)

    x = jax.random.normal(k_x, (B, S, H), jnp.float32)

    cl_adapter = CLAdapter(hidden=H, bottleneck=R)
    cl_adapter.add_adapter("task_0", k_t0)
    cl_adapter.add_adapter("task_1", k_t1)
    cl_adapter.current_task = "task_0"   # dispatch to task_0's adapter

    out = jax.block_until_ready(cl_adapter(x))
    ref = _reference(x, cl_adapter.adapters["task_0"])
    assert out.shape == x.shape
    assert jnp.allclose(out, ref, atol=1e-4, rtol=1e-4), "mismatch vs reference"

    # no-task path: identity
    cl_adapter.current_task = None
    passthrough = jax.block_until_ready(cl_adapter(x))
    assert jnp.array_equal(passthrough, x)

    # --- aligned fast path (H % 128 == 0): multi-step grid, no pad/slice ---
    B2, S2, H2, R2 = 4, 128, 256, 64
    k_x2, k_t2 = jax.random.split(jax.random.PRNGKey(1))
    x2 = jax.random.normal(k_x2, (B2, S2, H2), jnp.float32)
    big = CLAdapter(hidden=H2, bottleneck=R2)
    big.add_adapter("task_big", k_t2)
    out2 = jax.block_until_ready(big(x2))
    ref2 = _reference(x2, big.adapters["task_big"])
    assert out2.shape == x2.shape
    assert jnp.allclose(out2, ref2, atol=1e-2, rtol=1e-2), "mismatch (big shape)"

    # --- ragged-M path (M not a multiple of block_m, masked last block) ---
    B3, S3, H3, R3 = 3, 50, 256, 64
    k_x3, k_t3 = jax.random.split(jax.random.PRNGKey(2))
    x3 = jax.random.normal(k_x3, (B3, S3, H3), jnp.float32)
    rag = CLAdapter(hidden=H3, bottleneck=R3)
    rag.add_adapter("task_rag", k_t3)
    out3 = jax.block_until_ready(rag(x3))
    ref3 = _reference(x3, rag.adapters["task_rag"])
    assert out3.shape == x3.shape
    assert jnp.allclose(out3, ref3, atol=1e-2, rtol=1e-2), "mismatch (ragged M)"

    print("KERNEL_OK")
</pallas_src>

<mosaic_0001>
module attributes {stable_mosaic.version = 11 : i64} {
  func.func @k(%arg0: i32, %arg1: memref<8x128xf32, #tpu.memory_space<vmem>>, %arg2: memref<8x128xf32, #tpu.memory_space<vmem>>) attributes {dimension_semantics = [#tpu.dimension_semantics<arbitrary>], iteration_bounds = array<i64: 2>, scalar_prefetch = 0 : i64, scratch_operands = 0 : i64, tpu.core_type = #tpu.core_type<tc>, window_params = [{pipeline_mode = #tpu.pipeline_mode<synchronous>, transform_indices = @transform_0, window_bounds = array<i64: 8, 128>}, {pipeline_mode = #tpu.pipeline_mode<synchronous>, transform_indices = @transform_1, window_bounds = array<i64: 8, 128>}]} {
    %c0 = arith.constant 0 : index
    %c0_0 = arith.constant 0 : index
    %0 = vector.load %arg1[%c0, %c0_0] : memref<8x128xf32, #tpu.memory_space<vmem>>, vector<8x128xf32>
    %cst = arith.constant 2.000000e+00 : f32
    %1 = vector.broadcast %cst : f32 to vector<8x128xf32>
    %2 = arith.mulf %0, %1 : vector<8x128xf32>
    %c0_1 = arith.constant 0 : index
    %c0_2 = arith.constant 0 : index
    %3 = vector.load %arg2[%c0_1, %c0_2] : memref<8x128xf32, #tpu.memory_space<vmem>>, vector<8x128xf32>
    tpu.vector_store %arg2[%c0_1, %c0_2], %2 {strides = array<i32>} : memref<8x128xf32, #tpu.memory_space<vmem>>, vector<8x128xf32>,
    return
  }
  func.func @transform_0(%arg0: i32) -> (i32, i32) {
    %c0_i32 = arith.constant 0 : i32
    %c0_i32_0 = arith.constant 0 : i32
    %c0_i32_1 = arith.constant 0 : i32
    return %c0_i32, %c0_i32_0 : i32, i32
  }
  func.func @transform_1(%arg0: i32) -> (i32, i32) {
    %c0_i32 = arith.constant 0 : i32
    %c0_i32_0 = arith.constant 0 : i32
    %c0_i32_1 = arith.constant 0 : i32
    return %c0_i32, %c0_i32_0 : i32, i32
  }
}

module attributes {stable_mosaic.version = 11 : i64} {
  func.func @_adapter_kernel(%arg0: i32, %arg1: memref<16x128xf32, #tpu.memory_space<vmem>>, %arg2: memref<128x128xf32, #tpu.memory_space<vmem>>, %arg3: memref<1x128xf32, #tpu.memory_space<vmem>>, %arg4: memref<128x128xf32, #tpu.memory_space<vmem>>, %arg5: memref<1x128xf32, #tpu.memory_space<vmem>>, %arg6: memref<16x128xf32, #tpu.memory_space<vmem>>) attributes {dimension_semantics = [#tpu.dimension_semantics<parallel>], iteration_bounds = array<i64: 1>, scalar_prefetch = 0 : i64, scratch_operands = 0 : i64, tpu.core_type = #tpu.core_type<tc>, window_params = [{transform_indices = @transform_0, window_bounds = array<i64: 16, 128>}, {pipeline_mode = #tpu.pipeline_mode<synchronous>, transform_indices = @transform_1, window_bounds = array<i64: 128, 128>}, {pipeline_mode = #tpu.pipeline_mode<synchronous>, transform_indices = @transform_2, window_bounds = array<i64: 1, 128>}, {pipeline_mode = #tpu.pipeline_mode<synchronous>, transform_indices = @transform_3, window_bounds = array<i64: 128, 128>}, {pipeline_mode = #tpu.pipeline_mode<synchronous>, transform_indices = @transform_4, window_bounds = array<i64: 1, 128>}, {transform_indices = @transform_5, window_bounds = array<i64: 16, 128>}]} {
    %c0 = arith.constant 0 : index
    %c0_0 = arith.constant 0 : index
    %0 = vector.load %arg1[%c0, %c0_0] : memref<16x128xf32, #tpu.memory_space<vmem>>, vector<16x128xf32>
    %c0_1 = arith.constant 0 : index
    %c0_2 = arith.constant 0 : index
    %1 = vector.load %arg2[%c0_1, %c0_2] : memref<128x128xf32, #tpu.memory_space<vmem>>, vector<128x128xf32>
    %cst = arith.constant dense<0.000000e+00> : vector<16x128xf32>
    %2 = tpu.matmul %0, %1, %cst {dimension_numbers = #tpu.dot_dimension_numbers<[1], [0], [0], [1], [0, 0, 1, 1], [], []>} : vector<16x128xf32>, vector<128x128xf32>, vector<16x128xf32> -> vector<16x128xf32>
    %c0_3 = arith.constant 0 : index
    %c0_4 = arith.constant 0 : index
    %3 = vector.load %arg3[%c0_3, %c0_4] : memref<1x128xf32, #tpu.memory_space<vmem>>, vector<1x128xf32>
    %4 = vector.broadcast %3 : vector<1x128xf32> to vector<16x128xf32>
    %5 = arith.addf %2, %4 : vector<16x128xf32>
    %6 = arith.mulf %5, %5 : vector<16x128xf32>
    %7 = arith.mulf %5, %6 : vector<16x128xf32>
    %cst_5 = arith.constant 4.471500e-02 : f32
    %8 = vector.broadcast %cst_5 : f32 to vector<16x128xf32>
    %9 = arith.mulf %8, %7 : vector<16x128xf32>
    %10 = arith.addf %5, %9 : vector<16x128xf32>
    %cst_6 = arith.constant 0.797884583 : f32
    %11 = vector.broadcast %cst_6 : f32 to vector<16x128xf32>
    %12 = arith.mulf %11, %10 : vector<16x128xf32>
    %13 = math.tanh %12 : vector<16x128xf32>
    %cst_7 = arith.constant 1.000000e+00 : f32
    %14 = vector.broadcast %cst_7 : f32 to vector<16x128xf32>
    %15 = arith.addf %14, %13 : vector<16x128xf32>
    %cst_8 = arith.constant 5.000000e-01 : f32
    %16 = vector.broadcast %cst_8 : f32 to vector<16x128xf32>
    %17 = arith.mulf %16, %15 : vector<16x128xf32>
    %18 = arith.mulf %5, %17 : vector<16x128xf32>
    %c0_9 = arith.constant 0 : index
    %c0_10 = arith.constant 0 : index
    %19 = vector.load %arg4[%c0_9, %c0_10] : memref<128x128xf32, #tpu.memory_space<vmem>>, vector<128x128xf32>
    %cst_11 = arith.constant dense<0.000000e+00> : vector<16x128xf32>
    %20 = tpu.matmul %18, %19, %cst_11 {dimension_numbers = #tpu.dot_dimension_numbers<[1], [0], [0], [1], [0, 0, 1, 1], [], []>} : vector<16x128xf32>, vector<128x128xf32>, vector<16x128xf32> -> vector<16x128xf32>
    %c0_12 = arith.constant 0 : index
    %c0_13 = arith.constant 0 : index
    %21 = vector.load %arg5[%c0_12, %c0_13] : memref<1x128xf32, #tpu.memory_space<vmem>>, vector<1x128xf32>
    %22 = vector.broadcast %21 : vector<1x128xf32> to vector<16x128xf32>
    %23 = arith.addf %20, %22 : vector<16x128xf32>
    %24 = arith.addf %23, %0 : vector<16x128xf32>
    %c0_14 = arith.constant 0 : index
    %c0_15 = arith.constant 0 : index
    %25 = vector.load %arg6[%c0_14, %c0_15] : memref<16x128xf32, #tpu.memory_space<vmem>>, vector<16x128xf32>
    tpu.vector_store %arg6[%c0_14, %c0_15], %24 {strides = array<i32>} : memref<16x128xf32, #tpu.memory_space<vmem>>, vector<16x128xf32>,
    return
  }
  func.func @transform_0(%arg0: i32) -> (i32, i32) {
    %c0_i32 = arith.constant 0 : i32
    %c0_i32_0 = arith.constant 0 : i32
    return %arg0, %c0_i32 : i32, i32
  }
  func.func @transform_1(%arg0: i32) -> (i32, i32) {
    %c0_i32 = arith.constant 0 : i32
    %c0_i32_0 = arith.constant 0 : i32
    %c0_i32_1 = arith.constant 0 : i32
    return %c0_i32, %c0_i32_0 : i32, i32
  }
  func.func @transform_2(%arg0: i32) -> (i32, i32) {
    %c0_i32 = arith.constant 0 : i32
    %c0_i32_0 = arith.constant 0 : i32
    %c0_i32_1 = arith.constant 0 : i32
    return %c0_i32, %c0_i32_0 : i32, i32
  }
  func.func @transform_3(%arg0: i32) -> (i32, i32) {
    %c0_i32 = arith.constant 0 : i32
    %c0_i32_0 = arith.constant 0 : i32
    %c0_i32_1 = arith.constant 0 : i32
    return %c0_i32, %c0_i32_0 : i32, i32
  }
  func.func @transform_4(%arg0: i32) -> (i32, i32) {
    %c0_i32 = arith.constant 0 : i32
    %c0_i32_0 = arith.constant 0 : i32
    %c0_i32_1 = arith.constant 0 : i32
    return %c0_i32, %c0_i32_0 : i32, i32
  }
  func.func @transform_5(%arg0: i32) -> (i32, i32) {
    %c0_i32 = arith.constant 0 : i32
    %c0_i32_0 = arith.constant 0 : i32
    return %arg0, %c0_i32 : i32, i32
  }
}

</mosaic_0001>

<llo_original>
// kernel: tpu_custom_call.1
$region0: #{tpu_custom_call.1}
  #allocation0 [shape = 'u32[]', space=smem, size = 0x4, offset = 0x4, fixed_abs, tag = 'smem constant byte address 0x4 - core index']
  #allocation1 [shape = 'u32[144,128]{1,0:T(1,128)}', space=vmem, size = 0x12000, scoped, tag = 'internal scratch']
  %s0 = inlined_call_operand.hbm [shape: f32[8,128], index: 0, kind: input, shape index: {}]
  %s1 = inlined_call_operand.hbm [shape: f32[8,128], index: 1, kind: output, shape index: {}]
  %s2 = sld [smem:[#allocation0]]
  $region41: #{tpu_custom_call.1} parent=0
    _
  %s4 = ssub.s32 1, %s2
  %s5 = scalar_select 0, %s4, %s2
  $region1: #{tpu_custom_call.1} parent=0
    #allocation2 [shape = 'u8[4096]{0}', space=vmem, size = 0x1000, scoped, tag = 'input window, operand 0, single buffered']
    #allocation3 [shape = 's32[2]{0}', space=sflag, size = 0x8, scoped, tag = 'scoped memory for tpu_custom_call.1']
    #allocation4 [shape = 's32[2]{0}', space=sflag, size = 0x8, scoped, tag = 'scoped memory for tpu_custom_call.1']
    #allocation5 [shape = 'u8[4096]{0}', space=vmem, size = 0x1000, scoped, tag = 'output window, operand 0, single buffered']
    %6 = vsyncpa [#allocation3], 0
    %7 = vsyncpa [#allocation4], 0
    loop: start=0, step=1, limit=4
    $region2: #{tpu_custom_call.1} parent=1 // loop_pre_header
      _
    $region3: #{tpu_custom_call.1} parent=1 // loop_header
      %s9 = sphi 0, %s13
      %p10 = scmp.ge.s32.totalorder %s9, 4
      %s17 = sphi 0, %s17
      %s19 = sphi 0, %s17
      %s20 = sphi 0, %s19
      %s34 = sphi 0, %s20
      %s38 = sphi 0, %s38
      %s40 = sphi 0, %s38
      %s41 = sphi 0, %s40
      %s55 = sphi 0, %s41
    $region4: #{tpu_custom_call.1} parent=1 // loop_header_branch
      %12 = sbr.rel (%p10) target = $region8
    $region5: #{tpu_custom_call.1} parent=1 // loop_body
      %s14 = ssub.s32 %s9, 1
      %s15 = ssub.s32 %s9, 2
      %s16 = sadd.s32 %s9, 1
      %s18 = sadd.s32 %s17, 1
      %p21 = scmp.eq.s32.totalorder %s9, 1
      %p22 = scmp.ne.s32.totalorder %s17, %s19
      %p23 = scmp.eq.s32.totalorder %s9, 0
      %p24 = por %p22, %p23
      %p25 = scmp.ne.s32.totalorder %s17, %s19
      %p26 = scmp.eq.s32.totalorder %s14, 1
      %p27 = por %p25, %p26
      %p28 = scmp.ne.s32.totalorder %s19, %s20
      %p29 = scmp.eq.s32.totalorder %s14, 0
      %p30 = por %p28, %p29
      %p31 = scmp.ne.s32.totalorder %s19, %s20
      %p32 = scmp.eq.s32.totalorder %s15, 1
      %p33 = por %p31, %p32
      %p35 = scmp.ne.s32.totalorder %s20, %s34
      %p36 = scmp.eq.s32.totalorder %s15, 0
      %p37 = por %p35, %p36
      %s39 = sadd.s32 %s38, 1
      %p42 = scmp.eq.s32.totalorder %s9, 1
      %p43 = scmp.ne.s32.totalorder %s38, %s40
      %p44 = scmp.eq.s32.totalorder %s9, 0
      %p45 = por %p43, %p44
      %p46 = scmp.ne.s32.totalorder %s38, %s40
      %p47 = scmp.eq.s32.totalorder %s14, 1
      %p48 = por %p46, %p47
      %p49 = scmp.ne.s32.totalorder %s40, %s41
      %p50 = scmp.eq.s32.totalorder %s14, 0
      %p51 = por %p49, %p50
      %p52 = scmp.ne.s32.totalorder %s40, %s41
      %p53 = scmp.eq.s32.totalorder %s15, 1
      %p54 = por %p52, %p53
      %p56 = scmp.ne.s32.totalorder %s41, %s55
      %p57 = scmp.eq.s32.totalorder %s15, 0
      %p58 = por %p56, %p57
      %p59 = scmp.le.s32.totalorder 1, %s9
      %p60 = scmp.lt.s32.totalorder %s9, 3
      %p61 = pnand %p59, %p60
      %p62 = pneg %p61
      // Predicated region
      $region9: #{tpu_custom_call.1} parent=5 // pred_check
        _
      $region10: #{tpu_custom_call.1} parent=5 // pred_check_branch
        %64 = sbr.rel (%p61) target = $region12
      $region11: #{tpu_custom_call.1} parent=5 // pred_region
        %s65 = ssub.s32 %s9, 1
        // Predicated region
        $region13: #{tpu_custom_call.1} parent=11 // pred_check
          %p66 = pneg %p30
        $region14: #{tpu_custom_call.1} parent=11 // pred_check_branch
          %68 = sbr.rel (%p66) target = $region16
        $region15: #{tpu_custom_call.1} parent=11 // pred_region
          %s70 = ssub.s32 128, 128
          %71 = vsyncadd [#allocation3], %s70
          %s73 = sshll.u32 [#allocation2], 4
          %s74 = int_to_ptr.vmem [resolvable:$true] %s73
          %76 = dma.hbm_to_vmem [thread:$0]  %s0, 128, %s74, [#allocation3]
        $region16: #{tpu_custom_call.1} parent=11 // pred_fallthru
          _
      $region12: #{tpu_custom_call.1} parent=5 // pred_fallthru
        _
      %p77 = scmp.lt.s32.totalorder %s9, 2
      // Predicated region
      $region17: #{tpu_custom_call.1} parent=5 // pred_check
        %p78 = pneg %p77
      $region18: #{tpu_custom_call.1} parent=5 // pred_check_branch
        %80 = sbr.rel (%p78) target = $region20
      $region19: #{tpu_custom_call.1} parent=5 // pred_region
        _
      $region20: #{tpu_custom_call.1} parent=5 // pred_fallthru
        _
      %p81 = scmp.le.s32.totalorder 1, %s9
      %p82 = scmp.lt.s32.totalorder %s9, 3
      %p83 = pnand %p81, %p82
      %p84 = pneg %p83
      // Predicated region
      $region21: #{tpu_custom_call.1} parent=5 // pred_check
        _
      $region22: #{tpu_custom_call.1} parent=5 // pred_check_branch
        %86 = sbr.rel (%p83) target = $region24
      $region23: #{tpu_custom_call.1} parent=5 // pred_region
        %s87 = ssub.s32 %s9, 1
        // Predicated region
        $region25: #{tpu_custom_call.1} parent=23 // pred_check
          %p88 = pneg %p30
        $region26: #{tpu_custom_call.1} parent=23 // pred_check_branch
          %90 = sbr.rel (%p88) target = $region28
        $region27: #{tpu_custom_call.1} parent=23 // pred_region
          %91 = dma.done [#allocation3], 128
        $region28: #{tpu_custom_call.1} parent=23 // pred_fallthru
          _
        %p92 = pneg %p30
        %p93 = pneg %p27
        %p94 = pneg %p51
        %p95 = pneg %p48
        %v96 = vld [vmem:[#allocation2] sm:$0xff]
        %v97 = vmul.f32 %v96, 2.0
        %98 = vst [vmem:[#allocation5] sm:$0xff] %v97
        // Predicated region
        $region29: #{tpu_custom_call.1} parent=23 // pred_check
          %p99 = pneg %p48
        $region30: #{tpu_custom_call.1} parent=23 // pred_check_branch
          %101 = sbr.rel (%p99) target = $region32
        $region31: #{tpu_custom_call.1} parent=23 // pred_region
          %s103 = ssub.s32 128, 128
          %104 = vsyncadd [#allocation4], %s103
          %s106 = sshll.u32 [#allocation5], 4
          %s107 = int_to_ptr.vmem [resolvable:$true] %s106
          %109 = dma.vmem_to_hbm [thread:$0]  %s107, 128, %s1, [#allocation4]
        $region32: #{tpu_custom_call.1} parent=23 // pred_fallthru
          _
        // Predicated region
        $region33: #{tpu_custom_call.1} parent=23 // pred_check
          %p110 = pneg %p48
        $region34: #{tpu_custom_call.1} parent=23 // pred_check_branch
          %112 = sbr.rel (%p110) target = $region36
        $region35: #{tpu_custom_call.1} parent=23 // pred_region
          %113 = dma.done [#allocation4], 128
        $region36: #{tpu_custom_call.1} parent=23 // pred_fallthru
          _
      $region24: #{tpu_custom_call.1} parent=5 // pred_fallthru
        _
      %p114 = scmp.le.s32.totalorder 2, %s9
      // Predicated region
      $region37: #{tpu_custom_call.1} parent=5 // pred_check
        %p115 = pneg %p114
      $region38: #{tpu_custom_call.1} parent=5 // pred_check_branch
        %117 = sbr.rel (%p115) target = $region40
      $region39: #{tpu_custom_call.1} parent=5 // pred_region
        %s118 = ssub.s32 %s9, 2
      $region40: #{tpu_custom_call.1} parent=5 // pred_fallthru
        _
    $region6: #{tpu_custom_call.1} parent=1 // loop_footer
      %s13 = sadd.s32 1, %s9
    $region7: #{tpu_custom_call.1} parent=1 // loop_footer_branch
      %8 = sbr.rel target = $region3
    $region8: #{tpu_custom_call.1} parent=1 // loop_exit
      _
    %119 = vsyncpa [#allocation3], 1
    %s120 = scalar_lea.sflag [#allocation3], 1
    %121 = vsyncpa %s120, 1
    %122 = vsyncpa [#allocation4], 1
    %s123 = scalar_lea.sflag [#allocation4], 1
    %124 = vsyncpa %s123, 1

// kernel: _adapter_forward_jit.1
$region0: #{_adapter_forward_jit.1}
  #allocation0 [shape = 'u32[]', space=smem, size = 0x4, offset = 0x4, fixed_abs, tag = 'smem constant byte address 0x4 - core index']
  #allocation1 [shape = 'u32[144,128]{1,0:T(1,128)}', space=vmem, size = 0x12000, scoped, tag = 'internal scratch']
  %s0 = inlined_call_operand.vmem [shape: f32[16,128], index: 0, kind: input, shape index: {}]
  %s1 = inlined_call_operand.hbm [shape: f32[128,128], index: 1, kind: input, shape index: {}]
  %s2 = inlined_call_operand.vmem [shape: f32[1,128], index: 2, kind: input, shape index: {}]
  %s3 = inlined_call_operand.hbm [shape: f32[128,128], index: 3, kind: input, shape index: {}]
  %s4 = inlined_call_operand.vmem [shape: f32[1,128], index: 4, kind: input, shape index: {}]
  %s5 = inlined_call_operand.vmem [shape: f32[16,128], index: 5, kind: output, shape index: {}]
  %s6 = sld [smem:[#allocation0]]
  $region38: #{_adapter_forward_jit.1} parent=0
    _
  %s8 = ssub.s32 1, %s6
  %s9 = scalar_select 0, %s8, %s6
  $region1: #{_adapter_forward_jit.1} parent=0
    #allocation2 [shape = 'u8[65536]{0}', space=vmem, size = 0x10000, scoped, tag = 'input window, operand 1, single buffered']
    #allocation3 [shape = 's32[1]{0}', space=sflag, size = 0x4, scoped, tag = 'scoped memory for _adapter_forward_jit.1']
    #allocation4 [shape = 'u8[65536]{0}', space=vmem, size = 0x10000, scoped, tag = 'input window, operand 3, single buffered']
    #allocation5 [shape = 's32[1]{0}', space=sflag, size = 0x4, scoped, tag = 'scoped memory for _adapter_forward_jit.1']
    %10 = vsyncpa [#allocation3], 0
    %11 = vsyncpa [#allocation5], 0
    // Predicated region
    $region2: #{_adapter_forward_jit.1} parent=1 // pred_check
      _
    $region3: #{_adapter_forward_jit.1} parent=1 // pred_check_branch
      %13 = sbr.rel (0) target = $region5
    $region4: #{_adapter_forward_jit.1} parent=1 // pred_region
      _
    $region5: #{_adapter_forward_jit.1} parent=1 // pred_fallthru
      _
    // Predicated region
    $region6: #{_adapter_forward_jit.1} parent=1 // pred_check
      _
    $region7: #{_adapter_forward_jit.1} parent=1 // pred_check_branch
      %15 = sbr.rel (0) target = $region9
    $region8: #{_adapter_forward_jit.1} parent=1 // pred_region
      %s17 = ssub.s32 2048, 2048
      %18 = vsyncadd [#allocation3], %s17
      %s19 = sshll.u32 [#allocation2], 4
      %s20 = int_to_ptr.vmem [resolvable:$true] %s19
      %25 = dma.hbm_to_vmem [thread:$0]  %s1, 2048, %s20, [#allocation3], 128, 128, 8
    $region9: #{_adapter_forward_jit.1} parent=1 // pred_fallthru
      _
    // Predicated region
    $region10: #{_adapter_forward_jit.1} parent=1 // pred_check
      _
    $region11: #{_adapter_forward_jit.1} parent=1 // pred_check_branch
      %27 = sbr.rel (0) target = $region13
    $region12: #{_adapter_forward_jit.1} parent=1 // pred_region
      _
    $region13: #{_adapter_forward_jit.1} parent=1 // pred_fallthru
      _
    // Predicated region
    $region14: #{_adapter_forward_jit.1} parent=1 // pred_check
      _
    $region15: #{_adapter_forward_jit.1} parent=1 // pred_check_branch
      %29 = sbr.rel (0) target = $region17
    $region16: #{_adapter_forward_jit.1} parent=1 // pred_region
      %s31 = ssub.s32 2048, 2048
      %32 = vsyncadd [#allocation5], %s31
      %s33 = sshll.u32 [#allocation4], 4
      %s34 = int_to_ptr.vmem [resolvable:$true] %s33
      %39 = dma.hbm_to_vmem [thread:$0]  %s3, 2048, %s34, [#allocation5], 128, 128, 8
    $region17: #{_adapter_forward_jit.1} parent=1 // pred_fallthru
      _
    // Predicated region
    $region18: #{_adapter_forward_jit.1} parent=1 // pred_check
      _
    $region19: #{_adapter_forward_jit.1} parent=1 // pred_check_branch
      %41 = sbr.rel (0) target = $region21
    $region20: #{_adapter_forward_jit.1} parent=1 // pred_region
      _
    $region21: #{_adapter_forward_jit.1} parent=1 // pred_fallthru
      _
    // Predicated region
    $region22: #{_adapter_forward_jit.1} parent=1 // pred_check
      _
    $region23: #{_adapter_forward_jit.1} parent=1 // pred_check_branch
      %43 = sbr.rel (0) target = $region25
    $region24: #{_adapter_forward_jit.1} parent=1 // pred_region
      %44 = dma.done [#allocation3], 2048
    $region25: #{_adapter_forward_jit.1} parent=1 // pred_fallthru
      _
    // Predicated region
    $region26: #{_adapter_forward_jit.1} parent=1 // pred_check
      _
    $region27: #{_adapter_forward_jit.1} parent=1 // pred_check_branch
      %46 = sbr.rel (0) target = $region29
    $region28: #{_adapter_forward_jit.1} parent=1 // pred_region
      %47 = dma.done [#allocation5], 2048
    $region29: #{_adapter_forward_jit.1} parent=1 // pred_fallthru
      _
    %v48 = vld [vmem:[%s0] sm:$0xff]
    %v49 = vld [vmem:[%s0 + $0x8] sm:$0xff]
    %v50 = vld [vmem:[#allocation2] sm:$0xff]
    %v51 = vld [vmem:[#allocation2 + $0x8] sm:$0xff]
    %v52 = vld [vmem:[#allocation2 + $0x10] sm:$0xff]
    %v53 = vld [vmem:[#allocation2 + $0x18] sm:$0xff]
    %v54 = vld [vmem:[#allocation2 + $0x20] sm:$0xff]
    %v55 = vld [vmem:[#allocation2 + $0x28] sm:$0xff]
    %v56 = vld [vmem:[#allocation2 + $0x30] sm:$0xff]
    %v57 = vld [vmem:[#allocation2 + $0x38] sm:$0xff]
    %v58 = vld [vmem:[#allocation2 + $0x40] sm:$0xff]
    %v59 = vld [vmem:[#allocation2 + $0x48] sm:$0xff]
    %v60 = vld [vmem:[#allocation2 + $0x50] sm:$0xff]
    %v61 = vld [vmem:[#allocation2 + $0x58] sm:$0xff]
    %v62 = vld [vmem:[#allocation2 + $0x60] sm:$0xff]
    %v63 = vld [vmem:[#allocation2 + $0x68] sm:$0xff]
    %v64 = vld [vmem:[#allocation2 + $0x70] sm:$0xff]
    %v65 = vld [vmem:[#allocation2 + $0x78] sm:$0xff]
    %v66 = vld [vmem:[%s2] sm:$0x1]
    %v68 = vlaneseq
    %v69 = vshrl.u32 %v68, 7
    %v70 = vsub.s32 0, %v69
    %v71 = vrot.slane %v66, %v70
    %73 = vmatprep.subr.mxu0 0.0
    %74 = vmatpush1.msra.mxu0 %v65
    %75 = vmatprep.subr.mxu0 0.0
    %76 = vmatpush1.msra.mxu0 %v64
    %77 = vmatprep.subr.mxu0 0.0
    %78 = vmatpush1.msra.mxu0 %v63
    %79 = vmatprep.subr.mxu0 0.0
    %80 = vmatpush1.msra.mxu0 %v62
    %81 = vmatprep.subr.mxu0 0.0
    %82 = vmatpush1.msra.mxu0 %v61
    %83 = vmatprep.subr.mxu0 0.0
    %84 = vmatpush1.msra.mxu0 %v60
    %85 = vmatprep.subr.mxu0 0.0
    %86 = vmatpush1.msra.mxu0 %v59
    %87 = vmatprep.subr.mxu0 0.0
    %88 = vmatpush1.msra.mxu0 %v58
    %89 = vmatprep.subr.mxu0 0.0
    %90 = vmatpush1.msra.mxu0 %v57
    %91 = vmatprep.subr.mxu0 0.0
    %92 = vmatpush1.msra.mxu0 %v56
    %93 = vmatprep.subr.mxu0 0.0
    %94 = vmatpush1.msra.mxu0 %v55
    %95 = vmatprep.subr.mxu0 0.0
    %96 = vmatpush1.msra.mxu0 %v54
    %97 = vmatprep.subr.mxu0 0.0
    %98 = vmatpush1.msra.mxu0 %v53
    %99 = vmatprep.subr.mxu0 0.0
    %100 = vmatpush1.msra.mxu0 %v52
    %101 = vmatprep.subr.mxu0 0.0
    %102 = vmatpush1.msra.mxu0 %v51
    %103 = vmatprep.subr.mxu0 0.0
    %104 = vmatpush1.msra.mxu0 %v50
    %105 = vmatprep.subr.mxu0 0.0
    %106 = vmatpush2.msra.mxu0 0.0
    %107 = vmatprep.subr.mxu0 0.0
    %108 = vmatpush2.msra.mxu0 0.0
    %109 = vmatprep.subr.mxu0 0.0
    %110 = vmatpush2.msra.mxu0 0.0
    %111 = vmatprep.subr.mxu0 0.0
    %112 = vmatpush2.msra.mxu0 0.0
    %113 = vmatprep.subr.mxu0 0.0
    %114 = vmatpush2.msra.mxu0 0.0
    %115 = vmatprep.subr.mxu0 0.0
    %116 = vmatpush2.msra.mxu0 0.0
    %117 = vmatprep.subr.mxu0 0.0
    %118 = vmatpush2.msra.mxu0 0.0
    %119 = vmatprep.subr.mxu0 0.0
    %120 = vmatpush2.msra.mxu0 0.0
    %121 = vmatprep.subr.mxu0 0.0
    %122 = vmatpush2.msra.mxu0 0.0
    %123 = vmatprep.subr.mxu0 0.0
    %124 = vmatpush2.msra.mxu0 0.0
    %125 = vmatprep.subr.mxu0 0.0
    %126 = vmatpush2.msra.mxu0 0.0
    %127 = vmatprep.subr.mxu0 0.0
    %128 = vmatpush2.msra.mxu0 0.0
    %129 = vmatprep.subr.mxu0 0.0
    %130 = vmatpush2.msra.mxu0 0.0
    %131 = vmatprep.subr.mxu0 0.0
    %132 = vmatpush2.msra.mxu0 0.0
    %133 = vmatprep.subr.mxu0 0.0
    %134 = vmatpush2.msra.mxu0 0.0
    %135 = vmatprep.subr.mxu0 0.0
    %136 = vmatpush2.msra.mxu0 0.0
    %137 = vmatprep.mubr.f32.mxu0 0.0
    %138 = vmatmul.mubr.f32.gmra.mxu0 %v48
    %v139 = vpop.f32.mrf.mxu0
    %v140 = vadd.f32 %v71, %v139
    %v141 = vpop.f32.mrf.mxu0
    %142 = vmatprep.mubr.f32.mxu0 0.0
    %143 = vmatmul.mubr.f32.gmra.mxu0 %v49
    %v144 = vpop.f32.mrf.mxu0
    %v145 = vadd.f32 %v71, %v144
    %v146 = vpop.f32.mrf.mxu0
    %147 = vdwg.mxu0
    %v148 = vmul.f32 %v140, %v140
    %v149 = vmul.f32 %v145, %v145
    %v150 = vmul.f32 %v140, %v148
    %v151 = vmul.f32 %v145, %v149
    %v152 = vmul.f32 %v150, 0.044715
    %v153 = vmul.f32 %v151, 0.044715
    %v154 = vadd.f32 %v140, %v152
    %v155 = vadd.f32 %v145, %v153
    %v156 = vmul.f32 %v154, 0.7978846
    %v157 = vmul.f32 %v155, 0.7978846
    %v158 = vtanh.pop %v156
    %v159 = vtanh.pop %v157
    %v160 = vadd.f32 %v158, 1.0
    %v161 = vadd.f32 %v159, 1.0
    %v162 = vmul.f32 %v160, 0.5
    %v163 = vmul.f32 %v161, 0.5
    %v164 = vmul.f32 %v140, %v162
    %v165 = vmul.f32 %v145, %v163
    %v166 = vld [vmem:[#allocation4] sm:$0xff]
    %v167 = vld [vmem:[#allocation4 + $0x8] sm:$0xff]
    %v168 = vld [vmem:[#allocation4 + $0x10] sm:$0xff]
    %v169 = vld [vmem:[#allocation4 + $0x18] sm:$0xff]
    %v170 = vld [vmem:[#allocation4 + $0x20] sm:$0xff]
    %v171 = vld [vmem:[#allocation4 + $0x28] sm:$0xff]
    %v172 = vld [vmem:[#allocation4 + $0x30] sm:$0xff]
    %v173 = vld [vmem:[#allocation4 + $0x38] sm:$0xff]
    %v174 = vld [vmem:[#allocation4 + $0x40] sm:$0xff]
    %v175 = vld [vmem:[#allocation4 + $0x48] sm:$0xff]
    %v176 = vld [vmem:[#allocation4 + $0x50] sm:$0xff]
    %v177 = vld [vmem:[#allocation4 + $0x58] sm:$0xff]
    %v178 = vld [vmem:[#allocation4 + $0x60] sm:$0xff]
    %v179 = vld [vmem:[#allocation4 + $0x68] sm:$0xff]
    %v180 = vld [vmem:[#allocation4 + $0x70] sm:$0xff]
    %v181 = vld [vmem:[#allocation4 + $0x78] sm:$0xff]
    %v182 = vld [vmem:[%s4] sm:$0x1]
    %v184 = vlaneseq
    %v185 = vshrl.u32 %v184, 7
    %v186 = vsub.s32 0, %v185
    %v187 = vrot.slane %v182, %v186
    %189 = vmatprep.subr.mxu0 0.0
    %190 = vmatpush1.msra.mxu0 %v181
    %191 = vmatprep.subr.mxu0 0.0
    %192 = vmatpush1.msra.mxu0 %v180
    %193 = vmatprep.subr.mxu0 0.0
    %194 = vmatpush1.msra.mxu0 %v179
    %195 = vmatprep.subr.mxu0 0.0
    %196 = vmatpush1.msra.mxu0 %v178
    %197 = vmatprep.subr.mxu0 0.0
    %198 = vmatpush1.msra.mxu0 %v177
    %199 = vmatprep.subr.mxu0 0.0
    %200 = vmatpush1.msra.mxu0 %v176
    %201 = vmatprep.subr.mxu0 0.0
    %202 = vmatpush1.msra.mxu0 %v175
    %203 = vmatprep.subr.mxu0 0.0
    %204 = vmatpush1.msra.mxu0 %v174
    %205 = vmatprep.subr.mxu0 0.0
    %206 = vmatpush1.msra.mxu0 %v173
    %207 = vmatprep.subr.mxu0 0.0
    %208 = vmatpush1.msra.mxu0 %v172
    %209 = vmatprep.subr.mxu0 0.0
    %210 = vmatpush1.msra.mxu0 %v171
    %211 = vmatprep.subr.mxu0 0.0
    %212 = vmatpush1.msra.mxu0 %v170
    %213 = vmatprep.subr.mxu0 0.0
    %214 = vmatpush1.msra.mxu0 %v169
    %215 = vmatprep.subr.mxu0 0.0
    %216 = vmatpush1.msra.mxu0 %v168
    %217 = vmatprep.subr.mxu0 0.0
    %218 = vmatpush1.msra.mxu0 %v167
    %219 = vmatprep.subr.mxu0 0.0
    %220 = vmatpush1.msra.mxu0 %v166
    %221 = vmatprep.subr.mxu0 0.0
    %222 = vmatpush2.msra.mxu0 0.0
    %223 = vmatprep.subr.mxu0 0.0
    %224 = vmatpush2.msra.mxu0 0.0
    %225 = vmatprep.subr.mxu0 0.0
    %226 = vmatpush2.msra.mxu0 0.0
    %227 = vmatprep.subr.mxu0 0.0
    %228 = vmatpush2.msra.mxu0 0.0
    %229 = vmatprep.subr.mxu0 0.0
    %230 = vmatpush2.msra.mxu0 0.0
    %231 = vmatprep.subr.mxu0 0.0
    %232 = vmatpush2.msra.mxu0 0.0
    %233 = vmatprep.subr.mxu0 0.0
    %234 = vmatpush2.msra.mxu0 0.0
    %235 = vmatprep.subr.mxu0 0.0
    %236 = vmatpush2.msra.mxu0 0.0
    %237 = vmatprep.subr.mxu0 0.0
    %238 = vmatpush2.msra.mxu0 0.0
    %239 = vmatprep.subr.mxu0 0.0
    %240 = vmatpush2.msra.mxu0 0.0
    %241 = vmatprep.subr.mxu0 0.0
    %242 = vmatpush2.msra.mxu0 0.0
    %243 = vmatprep.subr.mxu0 0.0
    %244 = vmatpush2.msra.mxu0 0.0
    %245 = vmatprep.subr.mxu0 0.0
    %246 = vmatpush2.msra.mxu0 0.0
    %247 = vmatprep.subr.mxu0 0.0
    %248 = vmatpush2.msra.mxu0 0.0
    %249 = vmatprep.subr.mxu0 0.0
    %250 = vmatpush2.msra.mxu0 0.0
    %251 = vmatprep.subr.mxu0 0.0
    %252 = vmatpush2.msra.mxu0 0.0
    %253 = vmatprep.mubr.f32.mxu0 0.0
    %254 = vmatmul.mubr.f32.gmra.mxu0 %v164
    %v255 = vpop.f32.mrf.mxu0
    %v256 = vadd.f32 %v187, %v255
    %v257 = vpop.f32.mrf.mxu0
    %258 = vmatprep.mubr.f32.mxu0 0.0
    %259 = vmatmul.mubr.f32.gmra.mxu0 %v165
    %v260 = vpop.f32.mrf.mxu0
    %v261 = vadd.f32 %v187, %v260
    %v262 = vpop.f32.mrf.mxu0
    %263 = vdwg.mxu0
    %v264 = vadd.f32 %v256, %v48
    %v265 = vadd.f32 %v261, %v49
    %266 = vst [vmem:[%s5] sm:$0xff] %v264
    %267 = vst [vmem:[%s5 + $0x8] sm:$0xff] %v265
    // Predicated region
    $region30: #{_adapter_forward_jit.1} parent=1 // pred_check
      _
    $region31: #{_adapter_forward_jit.1} parent=1 // pred_check_branch
      %269 = sbr.rel (0) target = $region33
    $region32: #{_adapter_forward_jit.1} parent=1 // pred_region
      _
    $region33: #{_adapter_forward_jit.1} parent=1 // pred_fallthru
      _
    // Predicated region
    $region34: #{_adapter_forward_jit.1} parent=1 // pred_check
      _
    $region35: #{_adapter_forward_jit.1} parent=1 // pred_check_branch
      %271 = sbr.rel (0) target = $region37
    $region36: #{_adapter_forward_jit.1} parent=1 // pred_region
      _
    $region37: #{_adapter_forward_jit.1} parent=1 // pred_fallthru
      _
    %272 = vsyncpa [#allocation3], 1
    %273 = vsyncpa [#allocation5], 1

</llo_original>
